<compile_context>
chip_gen: v7x
topology: tpu7x:2x2x1
jax: 0.10.0
libtpu: 0.0.40
codegen_flags: <defaults>
</compile_context>

<pallas_src>
import functools

import jax
import jax.numpy as jnp
from jax import lax
from jax.experimental import pallas as pl
from jax.experimental.pallas import tpu as pltpu


def _pool_kernel(x_ref, attn_ref, o_ref, acc_ref, *, n_h, hw, thw, attn_resident):
    """x_ref: (TB, TC, THW); attn_ref: (n_blocks|1, TC, THW); o_ref: (TB, TC);
    acc_ref: (TB, TC, 128) f32 when THW % 128 == 0 else (TB, TC, 1) f32."""
    h = pl.program_id(2)

    @pl.when(h == 0)
    def _init():
        acc_ref[...] = jnp.zeros_like(acc_ref)

    # Pick this (c, h) tile's attention slab: dynamic leading index into the
    # VMEM-resident blocked table, or the streamed per-step block.
    a_idx = (pl.program_id(1) * n_h + h) if attn_resident else 0
    a = attn_ref[a_idx].astype(jnp.float32)          # (TC, THW)
    x = x_ref[...].astype(jnp.float32)               # (TB, TC, THW)
    p = x * a[None, :, :]

    def accum(prod):
        if thw % 128 == 0:
            # Sum 128-lane chunks with pure vreg-wise VPU adds (static aligned
            # lane slices); the cross-lane reduce is deferred to the epilogue.
            part = prod[:, :, 0:128]
            for j in range(1, thw // 128):
                part = part + prod[:, :, j * 128:(j + 1) * 128]
            acc_ref[...] += part
        else:
            # Single full-HW block (THW == HW, not a multiple of 128): one
            # cross-lane reduce per (b, c) tile.
            acc_ref[...] += jnp.sum(prod, axis=-1, keepdims=True)

    if hw % thw != 0:
        # Ragged spatial tail: only the last block masks the (uninitialized
        # VMEM) tail lanes; all other blocks take the unmasked fast path.
        @pl.when(h < n_h - 1)
        def _body():
            accum(p)

        @pl.when(h == n_h - 1)
        def _tail():
            lane = lax.broadcasted_iota(jnp.int32, p.shape, 2)
            accum(jnp.where(lane < (hw - h * thw), p, 0.0))
    else:
        accum(p)

    @pl.when(h == n_h - 1)
    def _store():
        o_ref[...] = jnp.sum(acc_ref[...], axis=-1).astype(o_ref.dtype)


def softmax_weighted_pool2d(x_nchw: jax.Array, logits: jax.Array, *,
                            block_bytes: int = 4 * 1024 * 1024,
                            attn_resident_bytes: int = 4 * 1024 * 1024) -> jax.Array:
    """x_nchw: (B, C, H, W); logits: (1, C, H, W). Returns (B, C) in x's dtype."""
    B, C, H, W = x_nchw.shape
    HW = H * W
    itemsize = x_nchw.dtype.itemsize

    # Batch-independent softmax over the spatial axis (tiny), once, in XLA.
    attn = jax.nn.softmax(logits.reshape(C, HW).astype(jnp.float32), axis=-1)
    x = x_nchw.reshape(B, C, HW)                     # metadata-only reshape

    # ---- tile selection (never pads / copies x) -----------------------------
    # Channel tile: lane dim of the (B, C) output -> 128, or full C when small.
    TC = C if C <= 128 else 128
    n_c = pl.cdiv(C, TC)
    # Batch tile: sublane dim of the output -> full B, or a multiple of 8.
    TB = B if B <= 8 else (16 if B >= 16 else 8)
    if B >= 16 and pl.cdiv(B, TB) * n_c < 2:
        TB = 8                                       # give both v7x cores work
    n_b = pl.cdiv(B, TB)
    # Spatial tile: full HW when the x block fits the budget, else the largest
    # multiple of 128 that does (ragged tail handled in-kernel by a lane mask).
    if TB * TC * HW * itemsize <= block_bytes:
        THW = HW
    else:
        THW = max(128, (block_bytes // (TB * TC * itemsize)) // 128 * 128)
        if HW % 128 == 0:
            THW = min(THW, HW)
    n_h = pl.cdiv(HW, THW)

    # ---- attention table: pre-blocked host side (tiny, zero padded) ---------
    attn_p = jnp.pad(attn, ((0, n_c * TC - C), (0, n_h * THW - HW)))
    attn_blk = (attn_p.reshape(n_c, TC, n_h, THW)
                      .transpose(0, 2, 1, 3)
                      .reshape(n_c * n_h, TC, THW))
    attn_resident = attn_blk.size * 4 <= attn_resident_bytes
    if attn_resident:
        # Constant block index -> DMA'd once, reused for the entire grid.
        attn_spec = pl.BlockSpec((n_c * n_h, TC, THW), lambda b, c, h: (0, 0, 0))
    else:
        attn_spec = pl.BlockSpec((1, TC, THW), lambda b, c, h: (c * n_h + h, 0, 0))

    acc_lanes = 128 if THW % 128 == 0 else 1

    # ---- VMEM budget: raise the scoped limit (v5e default is only 16 MiB) ---
    attn_vmem = attn_blk.size * 4 if attn_resident else TC * THW * 4
    vmem_est = (2 * TB * TC * THW * itemsize         # x (double buffered)
                + 2 * attn_vmem                      # attn
                + TB * TC * acc_lanes * 4            # accumulator scratch
                + 2 * TB * TC * itemsize)            # output (double buffered)
    vmem_limit = int(min(64 * 1024 * 1024, max(32 * 1024 * 1024, 2 * vmem_est)))

    kernel = functools.partial(_pool_kernel, n_h=n_h, hw=HW, thw=THW,
                               attn_resident=attn_resident)

    return pl.pallas_call(
        kernel,
        out_shape=jax.ShapeDtypeStruct((B, C), x_nchw.dtype),
        grid_spec=pltpu.PrefetchScalarGridSpec(
            num_scalar_prefetch=0,
            grid=(n_b, n_c, n_h),
            in_specs=[
                pl.BlockSpec((TB, TC, THW), lambda b, c, h: (b, c, h)),
                attn_spec,
            ],
            out_specs=pl.BlockSpec((TB, TC), lambda b, c, h: (b, c)),
            scratch_shapes=[pltpu.VMEM((TB, TC, acc_lanes), jnp.float32)],
        ),
        compiler_params=pltpu.CompilerParams(
            dimension_semantics=("parallel", "parallel", "arbitrary"),
            vmem_limit_bytes=vmem_limit,
        ),
        cost_estimate=pl.CostEstimate(
            flops=2 * B * C * HW,
            transcendentals=0,
            bytes_accessed=x.size * itemsize + attn_blk.size * 4 + B * C * itemsize,
        ),
    )(x, attn_blk)


def reference(x_nchw: jax.Array, logits: jax.Array) -> jax.Array:
    B, C, H, W = x_nchw.shape
    attn = jax.nn.softmax(logits.reshape(1, C, H * W), axis=-1).reshape(1, C, H, W)
    return (x_nchw * attn).sum(axis=(2, 3))


if __name__ == "__main__":
    key = jax.random.PRNGKey(0)

    # --- Small shape consistent with the module (single-block path) ---------
    B, C, H, W = 2, 4, 16, 16
    kx, kl, key = jax.random.split(key, 3)
    x = jax.random.normal(kx, (B, C, H, W), dtype=jnp.float32)
    # The module initializes logits to zeros; use small non-zero logits so the
    # softmax path is genuinely exercised (zeros reduce to mean pooling).
    logits = 0.1 * jax.random.normal(kl, (1, C, H, W), dtype=jnp.float32)

    out = jax.block_until_ready(softmax_weighted_pool2d(x, logits))
    ref = reference(x, logits)
    assert out.shape == (B, C), out.shape
    assert jnp.allclose(out, ref, atol=1e-5, rtol=1e-5)

    # --- Shape exercising multi-tile grid, ragged spatial tail (576 % 512),
    #     the widened accumulator and the resident blocked attention table ----
    B2, C2, H2, W2 = 16, 256, 24, 24
    kx2, kl2 = jax.random.split(key)
    x2 = jax.random.normal(kx2, (B2, C2, H2, W2), dtype=jnp.float32)
    logits2 = 0.1 * jax.random.normal(kl2, (1, C2, H2, W2), dtype=jnp.float32)

    out2 = jax.block_until_ready(softmax_weighted_pool2d(x2, logits2))
    ref2 = reference(x2, logits2)
    assert out2.shape == (B2, C2), out2.shape
    assert jnp.allclose(out2, ref2, atol=1e-4, rtol=1e-4)

    print("KERNEL_OK")
</pallas_src>

<mosaic_0001>
module attributes {stable_mosaic.version = 11 : i64} {
  func.func @_pool_kernel(%arg0: i32, %arg1: i32, %arg2: i32, %arg3: memref<2x4x256xf32, #tpu.memory_space<vmem>>, %arg4: memref<1x4x256xf32, #tpu.memory_space<vmem>>, %arg5: memref<2x4xf32, #tpu.memory_space<vmem>>, %arg6: memref<2x4x128xf32, #tpu.memory_space<vmem>>) attributes {dimension_semantics = [#tpu.dimension_semantics<parallel>, #tpu.dimension_semantics<parallel>, #tpu.dimension_semantics<arbitrary>], iteration_bounds = array<i64: 1, 1, 1>, scalar_prefetch = 0 : i64, scratch_operands = 1 : i64, tpu.core_type = #tpu.core_type<tc>, window_params = [{transform_indices = @transform_0, window_bounds = array<i64: 2, 4, 256>}, {pipeline_mode = #tpu.pipeline_mode<synchronous>, transform_indices = @transform_1, window_bounds = array<i64: 1, 4, 256>}, {transform_indices = @transform_2, window_bounds = array<i64: 2, 4>}]} {
    %c0_i32 = arith.constant 0 : i32
    %0 = arith.cmpi eq, %arg2, %c0_i32 : i32
    %1 = arith.extui %0 : i1 to i32
    %c0_i32_0 = arith.constant 0 : i32
    %2 = arith.cmpi ne, %1, %c0_i32_0 : i32
    scf.if %2 {
      %cst = arith.constant 0.000000e+00 : f32
      %21 = vector.broadcast %cst : f32 to vector<2x4x128xf32>
      %c0_13 = arith.constant 0 : index
      %c0_14 = arith.constant 0 : index
      %c0_15 = arith.constant 0 : index
      %22 = vector.load %arg6[%c0_13, %c0_14, %c0_15] : memref<2x4x128xf32, #tpu.memory_space<vmem>>, vector<2x4x128xf32>
      tpu.vector_store %arg6[%c0_13, %c0_14, %c0_15], %21 {strides = array<i32>} : memref<2x4x128xf32, #tpu.memory_space<vmem>>, vector<2x4x128xf32>,
    } else {
    }
    %c1_i32 = arith.constant 1 : i32
    %3 = arith.muli %arg1, %c1_i32 : i32
    %4 = arith.addi %3, %arg2 : i32
    %5 = arith.index_cast %4 : i32 to index
    %c0 = arith.constant 0 : index
    %c0_1 = arith.constant 0 : index
    %6 = vector.load %arg4[%5, %c0, %c0_1] : memref<1x4x256xf32, #tpu.memory_space<vmem>>, vector<1x4x256xf32>
    %7 = vector.shape_cast %6 : vector<1x4x256xf32> to vector<4x256xf32>
    %c0_2 = arith.constant 0 : index
    %c0_3 = arith.constant 0 : index
    %c0_4 = arith.constant 0 : index
    %8 = vector.load %arg3[%c0_2, %c0_3, %c0_4] : memref<2x4x256xf32, #tpu.memory_space<vmem>>, vector<2x4x256xf32>
    %9 = vector.shape_cast %7 : vector<4x256xf32> to vector<1x4x256xf32>
    %10 = vector.broadcast %9 : vector<1x4x256xf32> to vector<2x4x256xf32>
    %11 = arith.mulf %8, %10 : vector<2x4x256xf32>
    %12 = vector.extract_strided_slice %11 {offsets = [0, 0, 0], sizes = [2, 4, 128], strides = [1, 1, 1]} : vector<2x4x256xf32> to vector<2x4x128xf32>
    %13 = vector.extract_strided_slice %11 {offsets = [0, 0, 128], sizes = [2, 4, 128], strides = [1, 1, 1]} : vector<2x4x256xf32> to vector<2x4x128xf32>
    %14 = arith.addf %12, %13 : vector<2x4x128xf32>
    %c0_5 = arith.constant 0 : index
    %c0_6 = arith.constant 0 : index
    %c0_7 = arith.constant 0 : index
    %15 = vector.load %arg6[%c0_5, %c0_6, %c0_7] : memref<2x4x128xf32, #tpu.memory_space<vmem>>, vector<2x4x128xf32>
    %16 = arith.addf %15, %14 : vector<2x4x128xf32>
    %c0_8 = arith.constant 0 : index
    %c0_9 = arith.constant 0 : index
    %c0_10 = arith.constant 0 : index
    %17 = vector.load %arg6[%c0_8, %c0_9, %c0_10] : memref<2x4x128xf32, #tpu.memory_space<vmem>>, vector<2x4x128xf32>
    tpu.vector_store %arg6[%c0_8, %c0_9, %c0_10], %16 {strides = array<i32>} : memref<2x4x128xf32, #tpu.memory_space<vmem>>, vector<2x4x128xf32>,
    %c0_i32_11 = arith.constant 0 : i32
    %18 = arith.cmpi eq, %arg2, %c0_i32_11 : i32
    %19 = arith.extui %18 : i1 to i32
    %c0_i32_12 = arith.constant 0 : i32
    %20 = arith.cmpi ne, %19, %c0_i32_12 : i32
    scf.if %20 {
      %c0_13 = arith.constant 0 : index
      %c0_14 = arith.constant 0 : index
      %c0_15 = arith.constant 0 : index
      %21 = vector.load %arg6[%c0_13, %c0_14, %c0_15] : memref<2x4x128xf32, #tpu.memory_space<vmem>>, vector<2x4x128xf32>
      %cst = arith.constant dense<0.000000e+00> : vector<2x4xf32>
      %22 = vector.multi_reduction <add>, %21, %cst [2] : vector<2x4x128xf32> to vector<2x4xf32>
      %c0_16 = arith.constant 0 : index
      %c0_17 = arith.constant 0 : index
      %23 = vector.load %arg5[%c0_16, %c0_17] : memref<2x4xf32, #tpu.memory_space<vmem>>, vector<2x4xf32>
      tpu.vector_store %arg5[%c0_16, %c0_17], %22 {strides = array<i32>} : memref<2x4xf32, #tpu.memory_space<vmem>>, vector<2x4xf32>,
    } else {
    }
    return
  }
  func.func @transform_0(%arg0: i32, %arg1: i32, %arg2: i32) -> (i32, i32, i32) {
    %c0_i32 = arith.constant 0 : i32
    return %arg0, %arg1, %arg2 : i32, i32, i32
  }
  func.func @transform_1(%arg0: i32, %arg1: i32, %arg2: i32) -> (i32, i32, i32) {
    %c0_i32 = arith.constant 0 : i32
    %c0_i32_0 = arith.constant 0 : i32
    %c0_i32_1 = arith.constant 0 : i32
    %c0_i32_2 = arith.constant 0 : i32
    return %c0_i32, %c0_i32_0, %c0_i32_1 : i32, i32, i32
  }
  func.func @transform_2(%arg0: i32, %arg1: i32, %arg2: i32) -> (i32, i32) {
    %c0_i32 = arith.constant 0 : i32
    return %arg0, %arg1 : i32, i32
  }
}

</mosaic_0001>

<llo_original>
// kernel: tpu_custom_call.1
$region0: #{tpu_custom_call.1}
  #allocation0 [shape = 'u32[]', space=smem, size = 0x4, offset = 0x4, fixed_abs, tag = 'smem constant byte address 0x4 - core index']
  #allocation1 [shape = 'u32[144,128]{1,0:T(1,128)}', space=vmem, size = 0x12000, scoped, tag = 'internal scratch']
  #allocation2 [shape = 'f32[2,4,128]{2,1,0:T(4,128)}', space=vmem, size = 0x1000, scoped, tag = 'scratch operand']
  %s0 = inlined_call_operand.hbm [shape: f32[2,4,256], index: 0, kind: input, shape index: {}]
  %s1 = inlined_call_operand.hbm [shape: f32[1,4,256], index: 1, kind: input, shape index: {}]
  %s2 = inlined_call_operand.hbm [shape: f32[2,4], index: 2, kind: output, shape index: {}]
  %s3 = sld [smem:[#allocation0]]
  $region34: #{tpu_custom_call.1} parent=0
    _
  %s5 = ssub.s32 1, %s3
  %s6 = scalar_select 0, %s5, %s3
  $region1: #{tpu_custom_call.1} parent=0
    #allocation3 [shape = 'u8[8192]{0}', space=vmem, size = 0x2000, scoped, tag = 'input window, operand 0, single buffered']
    #allocation4 [shape = 's32[1]{0}', space=sflag, size = 0x4, scoped, tag = 'scoped memory for tpu_custom_call.1']
    #allocation5 [shape = 's32[1]{0}', space=sflag, size = 0x4, scoped, tag = 'scoped memory for tpu_custom_call.1']
    #allocation6 [shape = 'u8[4096]{0}', space=vmem, size = 0x1000, scoped, tag = 'input window, operand 1, single buffered']
    #allocation7 [shape = 's32[1]{0}', space=sflag, size = 0x4, scoped, tag = 'scoped memory for tpu_custom_call.1']
    #allocation8 [shape = 'u8[1024]{0}', space=vmem, size = 0x400, scoped, tag = 'output window, operand 0, single buffered']
    %7 = vsyncpa [#allocation4], 0
    %8 = vsyncpa [#allocation7], 0
    %9 = vsyncpa [#allocation5], 0
    // Predicated region
    $region2: #{tpu_custom_call.1} parent=1 // pred_check
      _
    $region3: #{tpu_custom_call.1} parent=1 // pred_check_branch
      %11 = sbr.rel (0) target = $region5
    $region4: #{tpu_custom_call.1} parent=1 // pred_region
      %s13 = ssub.s32 256, 256
      %14 = vsyncadd [#allocation4], %s13
      %s15 = sshll.u32 [#allocation3], 4
      %s16 = int_to_ptr.vmem [resolvable:$true] %s15
      %21 = dma.hbm_to_vmem [thread:$0]  %s0, 256, %s16, [#allocation4], 128, 128, 8
    $region5: #{tpu_custom_call.1} parent=1 // pred_fallthru
      _
    // Predicated region
    $region6: #{tpu_custom_call.1} parent=1 // pred_check
      _
    $region7: #{tpu_custom_call.1} parent=1 // pred_check_branch
      %23 = sbr.rel (0) target = $region9
    $region8: #{tpu_custom_call.1} parent=1 // pred_region
      %s25 = ssub.s32 128, 128
      %26 = vsyncadd [#allocation7], %s25
      %s28 = sshll.u32 [#allocation6], 4
      %s29 = int_to_ptr.vmem [resolvable:$true] %s28
      %31 = dma.hbm_to_vmem [thread:$0]  %s1, 128, %s29, [#allocation7]
    $region9: #{tpu_custom_call.1} parent=1 // pred_fallthru
      _
    // Predicated region
    $region10: #{tpu_custom_call.1} parent=1 // pred_check
      _
    $region11: #{tpu_custom_call.1} parent=1 // pred_check_branch
      %33 = sbr.rel (0) target = $region13
    $region12: #{tpu_custom_call.1} parent=1 // pred_region
      %34 = dma.done [#allocation4], 256
    $region13: #{tpu_custom_call.1} parent=1 // pred_fallthru
      _
    // Predicated region
    $region14: #{tpu_custom_call.1} parent=1 // pred_check
      _
    $region15: #{tpu_custom_call.1} parent=1 // pred_check_branch
      %36 = sbr.rel (0) target = $region17
    $region16: #{tpu_custom_call.1} parent=1 // pred_region
      %37 = dma.done [#allocation7], 128
    $region17: #{tpu_custom_call.1} parent=1 // pred_fallthru
      _
    %p38 = scmp.eq.s32.totalorder 0, 0
    // Predicated region
    $region18: #{tpu_custom_call.1} parent=1 // pred_check
      %p39 = pneg %p38
    $region19: #{tpu_custom_call.1} parent=1 // pred_check_branch
      %41 = sbr.rel (%p39) target = $region21
    $region20: #{tpu_custom_call.1} parent=1 // pred_region
      %42 = vst [vmem:[#allocation2] sm:$0xf] 0.0
      %43 = vst [vmem:[#allocation2 + $0x4] sm:$0xf] 0.0
    $region21: #{tpu_custom_call.1} parent=1 // pred_fallthru
      _
    %s44 = sadd.s32 0, 0
    %s45 = smul.u32 %s44, 2
    %s46 = smul.addr %s45, 4
    %s47 = scalar_lea.vmem [#allocation6], %s46
    %v48 = vld [vmem:[%s47] sm:$0xff]
    %v49 = vld [vmem:[#allocation3] sm:$0xff]
    %v50 = vld [vmem:[#allocation3 + $0x8] sm:$0xff]
    %v51 = vmul.f32 %v49, %v48
    %v52 = vmul.f32 %v50, %v48
    %v55 = vrot.slane %v51, 4
    %v56 = vrot.slane %v52, 4
    %v59 = vadd.f32 %v51, %v55
    %v60 = vadd.f32 %v52, %v56
    %v61 = vld [vmem:[#allocation2] sm:$0xf]
    %v62 = vld [vmem:[#allocation2 + $0x4] sm:$0xf]
    %v63 = vadd.f32 %v61, %v59
    %v64 = vadd.f32 %v62, %v60
    %65 = vst [vmem:[#allocation2] sm:$0xf] %v63
    %66 = vst [vmem:[#allocation2 + $0x4] sm:$0xf] %v64
    // Predicated region
    $region22: #{tpu_custom_call.1} parent=1 // pred_check
      %p67 = pneg %p38
    $region23: #{tpu_custom_call.1} parent=1 // pred_check_branch
      %69 = sbr.rel (%p67) target = $region25
    $region24: #{tpu_custom_call.1} parent=1 // pred_region
      %v70 = vld [vmem:[#allocation2] sm:$0xf]
      %v71 = vld [vmem:[#allocation2 + $0x4] sm:$0xf]
      %vm72 = vcmask 1043456
      %v73 = vsel %vm72, %v70, 0.0
      %74 = vadd.xlane.f32.xlu0 %v73
      %v75 = vpop.xlane.xlu0 %74
      %v76 = vsel %vm72, %v71, 0.0
      %77 = vadd.xlane.f32.xlu0 %v76
      %v78 = vpop.xlane.xlu0 %77
      %v81 = vlaneseq
      %v82 = vand.u32 %v81, 127
      %v83 = vlaneseq
      %v84 = vshrl.u32 %v83, 7
      %v85 = vsub.s32 %v82, %v84
      %v86 = vrot.slane %v75, %v85
      %v87 = vlaneseq
      %v88 = vshrl.u32 %v87, 7
      %v89 = vsub.s32 %v82, %v88
      %v90 = vrot.slane %v78, %v89
      %vm91 = vcmask 1041409
      %v92 = vsel %vm91, %v90, %v86
      %vm94 = vcmask 25600
      %95 = vst.msk [vmem:[#allocation8] sm:$0x3] %vm94, %v92
    $region25: #{tpu_custom_call.1} parent=1 // pred_fallthru
      _
    // Predicated region
    $region26: #{tpu_custom_call.1} parent=1 // pred_check
      _
    $region27: #{tpu_custom_call.1} parent=1 // pred_check_branch
      %97 = sbr.rel (0) target = $region29
    $region28: #{tpu_custom_call.1} parent=1 // pred_region
      %s99 = ssub.s32 32, 32
      %100 = vsyncadd [#allocation5], %s99
      %s102 = sshll.u32 [#allocation8], 4
      %s103 = int_to_ptr.vmem [resolvable:$true] %s102
      %105 = dma.vmem_to_hbm [thread:$0]  %s103, 32, %s2, [#allocation5]
    $region29: #{tpu_custom_call.1} parent=1 // pred_fallthru
      _
    // Predicated region
    $region30: #{tpu_custom_call.1} parent=1 // pred_check
      _
    $region31: #{tpu_custom_call.1} parent=1 // pred_check_branch
      %107 = sbr.rel (0) target = $region33
    $region32: #{tpu_custom_call.1} parent=1 // pred_region
      %108 = dma.done [#allocation5], 32
    $region33: #{tpu_custom_call.1} parent=1 // pred_fallthru
      _
    %109 = vsyncpa [#allocation4], 1
    %110 = vsyncpa [#allocation7], 1
    %111 = vsyncpa [#allocation5], 1

</llo_original>
